<compile_context>
chip_gen: v7x
topology: tpu7x:2x2x1
jax: 0.10.0
libtpu: 0.0.40
codegen_flags: <defaults>
</compile_context>

<pallas_src>
import math

import jax
import jax.numpy as jnp
from jax.experimental import pallas as pl
from jax.experimental.pallas import tpu as pltpu


def _qkv_head_kernel(x_ref, w_ref, b_ref, q_ref, k_ref, v_ref):
    # x_ref: (1, TM, C)  input dtype (cast to bf16 here for the MXU)
    # w_ref: (1, C, 3*hd) bf16   -- per-head fused [q | k | v] weight slab
    # b_ref: (1, 1, 3*hd) f32    -- per-head fused bias
    # q/k/v_ref: (1, 1, TM, hd)
    hd = q_ref.shape[-1]
    x = x_ref[0].astype(jnp.bfloat16)                                  # (TM, C)
    acc = jnp.dot(x, w_ref[0], preferred_element_type=jnp.float32)     # (TM, 3*hd)
    acc = acc + b_ref[0]                                               # bias in f32
    q_ref[0, 0, :, :] = acc[:, :hd].astype(q_ref.dtype)
    k_ref[0, 0, :, :] = acc[:, hd:2 * hd].astype(k_ref.dtype)
    v_ref[0, 0, :, :] = acc[:, 2 * hd:].astype(v_ref.dtype)


def qkv_projection(x, w_heads, b_heads, *, token_tile=1024,
                   vmem_limit_bytes=32 * 1024 * 1024):
    """x: (B, N, C); w_heads: (H, C, 3*hd) bf16; b_heads: (H, 1, 3*hd) f32.

    Returns q, k, v each of shape (B, H, N, hd) in x's dtype.
    """
    B, N, C = x.shape
    H, Cw, three_hd = w_heads.shape
    assert Cw == C, "weight / activation channel mismatch"
    hd = three_hd // 3

    # Token tile: largest of (token_tile, N). token_tile is a multiple of 8;
    # when N is smaller the block equals the full dim, which is always legal.
    tm = min(token_tile, N)
    grid = (B, pl.cdiv(N, tm), H)

    out_shape = tuple(jax.ShapeDtypeStruct((B, H, N, hd), x.dtype) for _ in range(3))
    out_spec = pl.BlockSpec((1, 1, tm, hd), lambda b, n, h: (b, h, n, 0))

    flops = 2 * B * N * C * H * three_hd
    bytes_accessed = (x.size * x.dtype.itemsize
                      + w_heads.size * w_heads.dtype.itemsize
                      + b_heads.size * b_heads.dtype.itemsize
                      + 3 * B * H * N * hd * x.dtype.itemsize)

    return pl.pallas_call(
        _qkv_head_kernel,
        out_shape=out_shape,
        grid_spec=pltpu.PrefetchScalarGridSpec(
            num_scalar_prefetch=0,
            grid=grid,
            in_specs=[
                # x tile: index constant along the innermost head axis -> DMAed
                # once per (batch, token-tile).
                pl.BlockSpec((1, tm, C), lambda b, n, h: (b, n, 0)),
                # per-head fused [q | k | v] weight slab (bf16).
                pl.BlockSpec((1, C, three_hd), lambda b, n, h: (h, 0, 0)),
                # per-head fused bias (f32).
                pl.BlockSpec((1, 1, three_hd), lambda b, n, h: (h, 0, 0)),
            ],
            out_specs=[out_spec, out_spec, out_spec],
        ),
        compiler_params=pltpu.CompilerParams(
            dimension_semantics=("parallel", "parallel", "arbitrary"),
            vmem_limit_bytes=vmem_limit_bytes,
        ),
        cost_estimate=pl.CostEstimate(
            flops=flops, transcendentals=0, bytes_accessed=bytes_accessed),
    )(x, w_heads, b_heads)


class LinearProjectionPallas:
    """JAX/Pallas re-implementation of the PyTorch LinearProjection module."""

    def __init__(self, dim, heads=8, dim_head=64, bias=True, key=None,
                 token_tile=1024):
        assert bias, "reference module path exercised here uses bias=True"
        inner_dim = dim_head * heads
        # The reference forward reshapes the projection output with C // heads,
        # which is only consistent when inner_dim == dim. Fail loudly otherwise.
        assert inner_dim == dim, (
            "LinearProjection forward requires dim_head * heads == dim "
            f"(got inner_dim={inner_dim}, dim={dim})")
        self.dim = dim
        self.heads = heads
        self.dim_head = dim_head
        self.inner_dim = inner_dim
        self.token_tile = token_tile

        if key is None:
            key = jax.random.PRNGKey(0)
        k1, k2, k3, k4 = jax.random.split(key, 4)

        # torch.nn.Linear default init: U(-1/sqrt(fan_in), 1/sqrt(fan_in)).
        bound = 1.0 / math.sqrt(dim)
        # f32 masters, stored as (in, out) == torch weight.T
        self.wq = jax.random.uniform(k1, (dim, inner_dim), jnp.float32, -bound, bound)
        self.bq = jax.random.uniform(k2, (inner_dim,), jnp.float32, -bound, bound)
        self.wkv = jax.random.uniform(k3, (dim, inner_dim * 2), jnp.float32, -bound, bound)
        self.bkv = jax.random.uniform(k4, (inner_dim * 2,), jnp.float32, -bound, bound)

        # Pack per-head fused [q | k | v] weight slabs once at init:
        #   w_heads[h, c, s*hd + d] = W_s[c, h*hd + d],  s in {q, k, v}
        # Stored in bf16 so the cast isn't paid per call and weight DMA halves.
        H, hd, I = heads, dim_head, inner_dim
        wq3 = self.wq.reshape(dim, H, hd)
        wk3 = self.wkv[:, :I].reshape(dim, H, hd)
        wv3 = self.wkv[:, I:].reshape(dim, H, hd)
        w_heads = jnp.stack([wq3, wk3, wv3], axis=0)            # (3, C, H, hd)
        w_heads = w_heads.transpose(2, 1, 0, 3).reshape(H, dim, 3 * hd)
        self.w_heads = w_heads.astype(jnp.bfloat16)             # (H, C, 3*hd)

        bq3 = self.bq.reshape(H, hd)
        bk3 = self.bkv[:I].reshape(H, hd)
        bv3 = self.bkv[I:].reshape(H, hd)
        self.b_heads = jnp.concatenate([bq3, bk3, bv3], axis=-1).reshape(H, 1, 3 * hd)

    def __call__(self, x):
        B, N, C = x.shape
        assert C == self.dim and self.inner_dim == C
        return qkv_projection(x, self.w_heads, self.b_heads,
                              token_tile=self.token_tile)


def _reference(x, mod: LinearProjectionPallas):
    """Pure-JAX f32 reference mirroring the PyTorch forward."""
    B, N, C = x.shape
    heads = mod.heads
    hd = C // heads
    yq = x @ mod.wq + mod.bq
    ykv = x @ mod.wkv + mod.bkv
    q = yq.reshape(B, N, heads, hd).transpose(0, 2, 1, 3)
    kv = ykv.reshape(B, N, 2, heads, hd).transpose(2, 0, 3, 1, 4)
    return q, kv[0], kv[1]


if __name__ == "__main__":
    # Small shapes consistent with the forward (inner_dim must equal C).
    B, N = 2, 8
    heads, dim_head = 4, 8
    dim = heads * dim_head            # C = 32, inner_dim = 32

    key = jax.random.PRNGKey(0)
    kx, kp = jax.random.split(key)
    x = jax.random.normal(kx, (B, N, dim), dtype=jnp.float32)

    mod = LinearProjectionPallas(dim, heads=heads, dim_head=dim_head,
                                 bias=True, key=kp)

    q, k, v = mod(x)
    jax.block_until_ready((q, k, v))

    q_ref, k_ref, v_ref = _reference(x, mod)
    assert q.shape == (B, heads, N, dim // heads)
    assert k.shape == (B, heads, N, dim // heads)
    assert v.shape == (B, heads, N, dim // heads)
    # bf16 operands with f32 accumulation: loosen tolerance vs the f32 reference.
    assert jnp.allclose(q, q_ref, atol=3e-2, rtol=3e-2)
    assert jnp.allclose(k, k_ref, atol=3e-2, rtol=3e-2)
    assert jnp.allclose(v, v_ref, atol=3e-2, rtol=3e-2)

    print("KERNEL_OK")
</pallas_src>

<mosaic_0001>
module attributes {stable_mosaic.version = 11 : i64} {
  func.func @_qkv_head_kernel(%arg0: i32, %arg1: i32, %arg2: i32, %arg3: memref<1x8x32xf32, #tpu.memory_space<vmem>>, %arg4: memref<1x32x24xbf16, #tpu.memory_space<vmem>>, %arg5: memref<1x1x24xf32, #tpu.memory_space<vmem>>, %arg6: memref<1x1x8x8xf32, #tpu.memory_space<vmem>>, %arg7: memref<1x1x8x8xf32, #tpu.memory_space<vmem>>, %arg8: memref<1x1x8x8xf32, #tpu.memory_space<vmem>>) attributes {dimension_semantics = [#tpu.dimension_semantics<parallel>, #tpu.dimension_semantics<parallel>, #tpu.dimension_semantics<arbitrary>], iteration_bounds = array<i64: 2, 1, 4>, scalar_prefetch = 0 : i64, scratch_operands = 0 : i64, tpu.core_type = #tpu.core_type<tc>, window_params = [{transform_indices = @transform_0, window_bounds = array<i64: 1, 8, 32>}, {transform_indices = @transform_1, window_bounds = array<i64: 1, 32, 24>}, {transform_indices = @transform_2, window_bounds = array<i64: 1, 1, 24>}, {transform_indices = @transform_3, window_bounds = array<i64: 1, 1, 8, 8>}, {transform_indices = @transform_4, window_bounds = array<i64: 1, 1, 8, 8>}, {transform_indices = @transform_5, window_bounds = array<i64: 1, 1, 8, 8>}]} {
    %c0 = arith.constant 0 : index
    %c0_0 = arith.constant 0 : index
    %c0_1 = arith.constant 0 : index
    %0 = vector.load %arg3[%c0, %c0_0, %c0_1] : memref<1x8x32xf32, #tpu.memory_space<vmem>>, vector<1x8x32xf32>
    %1 = vector.shape_cast %0 : vector<1x8x32xf32> to vector<8x32xf32>
    %2 = arith.truncf %1 : vector<8x32xf32> to vector<8x32xbf16>
    %c0_2 = arith.constant 0 : index
    %c0_3 = arith.constant 0 : index
    %c0_4 = arith.constant 0 : index
    %3 = vector.load %arg4[%c0_2, %c0_3, %c0_4] : memref<1x32x24xbf16, #tpu.memory_space<vmem>>, vector<1x32x24xbf16>
    %4 = vector.shape_cast %3 : vector<1x32x24xbf16> to vector<32x24xbf16>
    %cst = arith.constant dense<0.000000e+00> : vector<8x24xf32>
    %5 = tpu.matmul %2, %4, %cst {dimension_numbers = #tpu.dot_dimension_numbers<[1], [0], [0], [1], [0, 0, 1, 1], [], []>} : vector<8x32xbf16>, vector<32x24xbf16>, vector<8x24xf32> -> vector<8x24xf32>
    %c0_5 = arith.constant 0 : index
    %c0_6 = arith.constant 0 : index
    %c0_7 = arith.constant 0 : index
    %6 = vector.load %arg5[%c0_5, %c0_6, %c0_7] : memref<1x1x24xf32, #tpu.memory_space<vmem>>, vector<1x1x24xf32>
    %7 = vector.shape_cast %6 : vector<1x1x24xf32> to vector<1x24xf32>
    %8 = vector.broadcast %7 : vector<1x24xf32> to vector<8x24xf32>
    %9 = arith.addf %5, %8 : vector<8x24xf32>
    %10 = vector.extract_strided_slice %9 {offsets = [0, 0], sizes = [8, 8], strides = [1, 1]} : vector<8x24xf32> to vector<8x8xf32>
    %c0_8 = arith.constant 0 : index
    %c0_9 = arith.constant 0 : index
    %c0_10 = arith.constant 0 : index
    %c0_11 = arith.constant 0 : index
    %11 = vector.load %arg6[%c0_8, %c0_9, %c0_10, %c0_11] : memref<1x1x8x8xf32, #tpu.memory_space<vmem>>, vector<1x1x8x8xf32>
    %12 = vector.shape_cast %11 : vector<1x1x8x8xf32> to vector<8x8xf32>
    %13 = vector.shape_cast %10 : vector<8x8xf32> to vector<1x1x8x8xf32>
    tpu.vector_store %arg6[%c0_8, %c0_9, %c0_10, %c0_11], %13 {strides = array<i32>} : memref<1x1x8x8xf32, #tpu.memory_space<vmem>>, vector<1x1x8x8xf32>,
    %14 = vector.extract_strided_slice %9 {offsets = [0, 8], sizes = [8, 8], strides = [1, 1]} : vector<8x24xf32> to vector<8x8xf32>
    %c0_12 = arith.constant 0 : index
    %c0_13 = arith.constant 0 : index
    %c0_14 = arith.constant 0 : index
    %c0_15 = arith.constant 0 : index
    %15 = vector.load %arg7[%c0_12, %c0_13, %c0_14, %c0_15] : memref<1x1x8x8xf32, #tpu.memory_space<vmem>>, vector<1x1x8x8xf32>
    %16 = vector.shape_cast %15 : vector<1x1x8x8xf32> to vector<8x8xf32>
    %17 = vector.shape_cast %14 : vector<8x8xf32> to vector<1x1x8x8xf32>
    tpu.vector_store %arg7[%c0_12, %c0_13, %c0_14, %c0_15], %17 {strides = array<i32>} : memref<1x1x8x8xf32, #tpu.memory_space<vmem>>, vector<1x1x8x8xf32>,
    %18 = vector.extract_strided_slice %9 {offsets = [0, 16], sizes = [8, 8], strides = [1, 1]} : vector<8x24xf32> to vector<8x8xf32>
    %c0_16 = arith.constant 0 : index
    %c0_17 = arith.constant 0 : index
    %c0_18 = arith.constant 0 : index
    %c0_19 = arith.constant 0 : index
    %19 = vector.load %arg8[%c0_16, %c0_17, %c0_18, %c0_19] : memref<1x1x8x8xf32, #tpu.memory_space<vmem>>, vector<1x1x8x8xf32>
    %20 = vector.shape_cast %19 : vector<1x1x8x8xf32> to vector<8x8xf32>
    %21 = vector.shape_cast %18 : vector<8x8xf32> to vector<1x1x8x8xf32>
    tpu.vector_store %arg8[%c0_16, %c0_17, %c0_18, %c0_19], %21 {strides = array<i32>} : memref<1x1x8x8xf32, #tpu.memory_space<vmem>>, vector<1x1x8x8xf32>,
    return
  }
  func.func @transform_0(%arg0: i32, %arg1: i32, %arg2: i32) -> (i32, i32, i32) {
    %c0_i32 = arith.constant 0 : i32
    %c0_i32_0 = arith.constant 0 : i32
    return %arg0, %arg1, %c0_i32 : i32, i32, i32
  }
  func.func @transform_1(%arg0: i32, %arg1: i32, %arg2: i32) -> (i32, i32, i32) {
    %c0_i32 = arith.constant 0 : i32
    %c0_i32_0 = arith.constant 0 : i32
    %c0_i32_1 = arith.constant 0 : i32
    return %arg2, %c0_i32, %c0_i32_0 : i32, i32, i32
  }
  func.func @transform_2(%arg0: i32, %arg1: i32, %arg2: i32) -> (i32, i32, i32) {
    %c0_i32 = arith.constant 0 : i32
    %c0_i32_0 = arith.constant 0 : i32
    %c0_i32_1 = arith.constant 0 : i32
    return %arg2, %c0_i32, %c0_i32_0 : i32, i32, i32
  }
  func.func @transform_3(%arg0: i32, %arg1: i32, %arg2: i32) -> (i32, i32, i32, i32) {
    %c0_i32 = arith.constant 0 : i32
    %c0_i32_0 = arith.constant 0 : i32
    return %arg0, %arg2, %arg1, %c0_i32 : i32, i32, i32, i32
  }
  func.func @transform_4(%arg0: i32, %arg1: i32, %arg2: i32) -> (i32, i32, i32, i32) {
    %c0_i32 = arith.constant 0 : i32
    %c0_i32_0 = arith.constant 0 : i32
    return %arg0, %arg2, %arg1, %c0_i32 : i32, i32, i32, i32
  }
  func.func @transform_5(%arg0: i32, %arg1: i32, %arg2: i32) -> (i32, i32, i32, i32) {
    %c0_i32 = arith.constant 0 : i32
    %c0_i32_0 = arith.constant 0 : i32
    return %arg0, %arg2, %arg1, %c0_i32 : i32, i32, i32, i32
  }
}

</mosaic_0001>

<llo_original>
// kernel: tpu_custom_call.1
$region0: #{tpu_custom_call.1}
  #allocation0 [shape = 'u32[]', space=smem, size = 0x4, offset = 0x4, fixed_abs, tag = 'smem constant byte address 0x4 - core index']
  #allocation1 [shape = 'u32[144,128]{1,0:T(1,128)}', space=vmem, size = 0x12000, scoped, tag = 'internal scratch']
  %s0 = inlined_call_operand.vmem [shape: f32[2,8,32], index: 0, kind: input, shape index: {}]
  %s1 = inlined_call_operand.vmem [shape: bf16[4,32,24], index: 1, kind: input, shape index: {}]
  %s2 = inlined_call_operand.vmem [shape: f32[4,1,24], index: 2, kind: input, shape index: {}]
  %s3 = inlined_call_operand.hbm [shape: f32[2,4,8,8], index: 3, kind: output, shape index: {0}]
  %s4 = inlined_call_operand.hbm [shape: f32[2,4,8,8], index: 4, kind: output, shape index: {1}]
  %s5 = inlined_call_operand.hbm [shape: f32[2,4,8,8], index: 5, kind: output, shape index: {2}]
  %6 = xla_tuple %s3, %s4, %s5
  %s7 = sld [smem:[#allocation0]]
  $region61: #{tpu_custom_call.1} parent=0
    _
  %s9 = ssub.s32 1, %s7
  %s10 = scalar_select 0, %s9, %s7
  $region1: #{tpu_custom_call.1} parent=0
    #allocation2 [shape = 'u8[8192]{0}', space=vmem, size = 0x2000, scoped, tag = 'output window, operand 0']
    #allocation3 [shape = 's32[2]{0}', space=sflag, size = 0x8, scoped, tag = 'scoped memory for tpu_custom_call.1']
    #allocation4 [shape = 'u8[8192]{0}', space=vmem, size = 0x2000, scoped, tag = 'output window, operand 1']
    #allocation5 [shape = 's32[2]{0}', space=sflag, size = 0x8, scoped, tag = 'scoped memory for tpu_custom_call.1']
    #allocation6 [shape = 'u8[8192]{0}', space=vmem, size = 0x2000, scoped, tag = 'output window, operand 2']
    %11 = vsyncpa [#allocation3], 0
    %s12 = scalar_lea.sflag [#allocation3], 1
    %13 = vsyncpa %s12, 0
    %14 = vsyncpa [#allocation5], 0
    %s15 = scalar_lea.sflag [#allocation5], 1
    %16 = vsyncpa %s15, 0
    loop: start=0, step=1, limit=10
    $region2: #{tpu_custom_call.1} parent=1 // loop_pre_header
      _
    $region3: #{tpu_custom_call.1} parent=1 // loop_header
      %s18 = sphi 0, %s22
      %p19 = scmp.ge.s32.totalorder %s18, 10
      %s25 = sphi 0, %s44
      %s26 = sphi 0, %s40
      %s27 = sphi 0, %s36
      %s28 = sphi 0, %s25
      %s29 = sphi 0, %s26
      %s30 = sphi 0, %s27
      %s31 = sphi 0, %s28
      %s32 = sphi 0, %s29
      %s33 = sphi 0, %s30
      %s49 = sphi 0, %s51
      %s52 = sphi 0, %s49
      %s53 = sphi 0, %s52
      %s69 = sphi 0, %s53
      %s75 = sphi 0, %s77
      %s78 = sphi 0, %s75
      %s79 = sphi 0, %s78
      %s95 = sphi 0, %s79
      %s101 = sphi 0, %s103
      %s104 = sphi 0, %s101
      %s105 = sphi 0, %s104
      %s121 = sphi 0, %s105
      %s131 = sphi 0, %s133
      %s134 = sphi 0, %s131
      %s135 = sphi 0, %s134
      %s151 = sphi 0, %s135
      %s161 = sphi 0, %s163
      %s164 = sphi 0, %s161
      %s165 = sphi 0, %s164
      %s181 = sphi 0, %s165
      %s191 = sphi 0, %s193
      %s194 = sphi 0, %s191
      %s195 = sphi 0, %s194
      %s211 = sphi 0, %s195
    $region4: #{tpu_custom_call.1} parent=1 // loop_header_branch
      %21 = sbr.rel (%p19) target = $region8
    $region5: #{tpu_custom_call.1} parent=1 // loop_body
      %s23 = ssub.s32 %s18, 1
      %s24 = ssub.s32 %s18, 2
      %s34 = sadd.s32 1, %s27
      %p35 = scmp.ge.s32.totalorder %s34, 4
      %s36 = scalar_select %p35, 0, %s34
      %s37 = sadd.s32 1, %s26
      %s38 = scalar_select %p35, %s37, %s26
      %p39 = scmp.ge.s32.totalorder %s38, 1
      %s40 = scalar_select %p39, 0, %s38
      %s41 = sadd.s32 1, %s25
      %s42 = scalar_select %p39, %s41, %s25
      %p43 = scmp.ge.s32.totalorder %s42, 2
      %s44 = scalar_select %p43, 0, %s42
      %s45 = ssub.s32 %s25, %s44
      %s46 = ssub.s32 %s26, %s40
      %s47 = sor.u32 %s45, %s46
      %p48 = scmp.eq.s32.totalorder %s47, 0
      %s50 = sadd.s32 %s49, 1
      %s51 = scalar_select %p48, %s49, %s50
      %p54 = pneg %p48
      %p55 = scmp.eq.s32.totalorder %s18, 7
      %p56 = por %p54, %p55
      %p57 = scmp.ne.s32.totalorder %s49, %s52
      %p58 = scmp.eq.s32.totalorder %s18, 0
      %p59 = por %p57, %p58
      %p60 = scmp.ne.s32.totalorder %s49, %s52
      %p61 = scmp.eq.s32.totalorder %s23, 7
      %p62 = por %p60, %p61
      %p63 = scmp.ne.s32.totalorder %s52, %s53
      %p64 = scmp.eq.s32.totalorder %s23, 0
      %p65 = por %p63, %p64
      %p66 = scmp.ne.s32.totalorder %s52, %s53
      %p67 = scmp.eq.s32.totalorder %s24, 7
      %p68 = por %p66, %p67
      %p70 = scmp.ne.s32.totalorder %s53, %s69
      %p71 = scmp.eq.s32.totalorder %s24, 0
      %p72 = por %p70, %p71
      %s73 = ssub.s32 %s27, %s36
      %p74 = scmp.eq.s32.totalorder %s73, 0
      %s76 = sadd.s32 %s75, 1
      %s77 = scalar_select %p74, %s75, %s76
      %p80 = pneg %p74
      %p81 = scmp.eq.s32.totalorder %s18, 7
      %p82 = por %p80, %p81
      %p83 = scmp.ne.s32.totalorder %s75, %s78
      %p84 = scmp.eq.s32.totalorder %s18, 0
      %p85 = por %p83, %p84
      %p86 = scmp.ne.s32.totalorder %s75, %s78
      %p87 = scmp.eq.s32.totalorder %s23, 7
      %p88 = por %p86, %p87
      %p89 = scmp.ne.s32.totalorder %s78, %s79
      %p90 = scmp.eq.s32.totalorder %s23, 0
      %p91 = por %p89, %p90
      %p92 = scmp.ne.s32.totalorder %s78, %s79
      %p93 = scmp.eq.s32.totalorder %s24, 7
      %p94 = por %p92, %p93
      %p96 = scmp.ne.s32.totalorder %s79, %s95
      %p97 = scmp.eq.s32.totalorder %s24, 0
      %p98 = por %p96, %p97
      %s99 = ssub.s32 %s27, %s36
      %p100 = scmp.eq.s32.totalorder %s99, 0
      %s102 = sadd.s32 %s101, 1
      %s103 = scalar_select %p100, %s101, %s102
      %p106 = pneg %p100
      %p107 = scmp.eq.s32.totalorder %s18, 7
      %p108 = por %p106, %p107
      %p109 = scmp.ne.s32.totalorder %s101, %s104
      %p110 = scmp.eq.s32.totalorder %s18, 0
      %p111 = por %p109, %p110
      %p112 = scmp.ne.s32.totalorder %s101, %s104
      %p113 = scmp.eq.s32.totalorder %s23, 7
      %p114 = por %p112, %p113
      %p115 = scmp.ne.s32.totalorder %s104, %s105
      %p116 = scmp.eq.s32.totalorder %s23, 0
      %p117 = por %p115, %p116
      %p118 = scmp.ne.s32.totalorder %s104, %s105
      %p119 = scmp.eq.s32.totalorder %s24, 7
      %p120 = por %p118, %p119
      %p122 = scmp.ne.s32.totalorder %s105, %s121
      %p123 = scmp.eq.s32.totalorder %s24, 0
      %p124 = por %p122, %p123
      %s125 = ssub.s32 %s25, %s44
      %s126 = ssub.s32 %s27, %s36
      %s127 = sor.u32 %s125, %s126
      %s128 = ssub.s32 %s26, %s40
      %s129 = sor.u32 %s127, %s128
      %p130 = scmp.eq.s32.totalorder %s129, 0
      %s132 = sadd.s32 %s131, 1
      %s133 = scalar_select %p130, %s131, %s132
      %p136 = pneg %p130
      %p137 = scmp.eq.s32.totalorder %s18, 7
      %p138 = por %p136, %p137
      %p139 = scmp.ne.s32.totalorder %s131, %s134
      %p140 = scmp.eq.s32.totalorder %s18, 0
      %p141 = por %p139, %p140
      %p142 = scmp.ne.s32.totalorder %s131, %s134
      %p143 = scmp.eq.s32.totalorder %s23, 7
      %p144 = por %p142, %p143
      %p145 = scmp.ne.s32.totalorder %s134, %s135
      %p146 = scmp.eq.s32.totalorder %s23, 0
      %p147 = por %p145, %p146
      %p148 = scmp.ne.s32.totalorder %s134, %s135
      %p149 = scmp.eq.s32.totalorder %s24, 7
      %p150 = por %p148, %p149
      %p152 = scmp.ne.s32.totalorder %s135, %s151
      %p153 = scmp.eq.s32.totalorder %s24, 0
      %p154 = por %p152, %p153
      %s155 = ssub.s32 %s25, %s44
      %s156 = ssub.s32 %s27, %s36
      %s157 = sor.u32 %s155, %s156
      %s158 = ssub.s32 %s26, %s40
      %s159 = sor.u32 %s157, %s158
      %p160 = scmp.eq.s32.totalorder %s159, 0
      %s162 = sadd.s32 %s161, 1
      %s163 = scalar_select %p160, %s161, %s162
      %p166 = pneg %p160
      %p167 = scmp.eq.s32.totalorder %s18, 7
      %p168 = por %p166, %p167
      %p169 = scmp.ne.s32.totalorder %s161, %s164
      %p170 = scmp.eq.s32.totalorder %s18, 0
      %p171 = por %p169, %p170
      %p172 = scmp.ne.s32.totalorder %s161, %s164
      %p173 = scmp.eq.s32.totalorder %s23, 7
      %p174 = por %p172, %p173
      %p175 = scmp.ne.s32.totalorder %s164, %s165
      %p176 = scmp.eq.s32.totalorder %s23, 0
      %p177 = por %p175, %p176
      %p178 = scmp.ne.s32.totalorder %s164, %s165
      %p179 = scmp.eq.s32.totalorder %s24, 7
      %p180 = por %p178, %p179
      %p182 = scmp.ne.s32.totalorder %s165, %s181
      %p183 = scmp.eq.s32.totalorder %s24, 0
      %p184 = por %p182, %p183
      %s185 = ssub.s32 %s25, %s44
      %s186 = ssub.s32 %s27, %s36
      %s187 = sor.u32 %s185, %s186
      %s188 = ssub.s32 %s26, %s40
      %s189 = sor.u32 %s187, %s188
      %p190 = scmp.eq.s32.totalorder %s189, 0
      %s192 = sadd.s32 %s191, 1
      %s193 = scalar_select %p190, %s191, %s192
      %p196 = pneg %p190
      %p197 = scmp.eq.s32.totalorder %s18, 7
      %p198 = por %p196, %p197
      %p199 = scmp.ne.s32.totalorder %s191, %s194
      %p200 = scmp.eq.s32.totalorder %s18, 0
      %p201 = por %p199, %p200
      %p202 = scmp.ne.s32.totalorder %s191, %s194
      %p203 = scmp.eq.s32.totalorder %s23, 7
      %p204 = por %p202, %p203
      %p205 = scmp.ne.s32.totalorder %s194, %s195
      %p206 = scmp.eq.s32.totalorder %s23, 0
      %p207 = por %p205, %p206
      %p208 = scmp.ne.s32.totalorder %s194, %s195
      %p209 = scmp.eq.s32.totalorder %s24, 7
      %p210 = por %p208, %p209
      %p212 = scmp.ne.s32.totalorder %s195, %s211
      %p213 = scmp.eq.s32.totalorder %s24, 0
      %p214 = por %p212, %p213
      %p215 = scmp.le.s32.totalorder 1, %s18
      %p216 = scmp.lt.s32.totalorder %s18, 9
      %p217 = pnand %p215, %p216
      %p218 = pneg %p217
      // Predicated region
      $region9: #{tpu_custom_call.1} parent=5 // pred_check
        _
      $region10: #{tpu_custom_call.1} parent=5 // pred_check_branch
        %220 = sbr.rel (%p217) target = $region12
      $region11: #{tpu_custom_call.1} parent=5 // pred_region
        %s221 = ssub.s32 %s18, 1
      $region12: #{tpu_custom_call.1} parent=5 // pred_fallthru
        _
      %p222 = scmp.lt.s32.totalorder %s18, 8
      // Predicated region
      $region13: #{tpu_custom_call.1} parent=5 // pred_check
        %p223 = pneg %p222
      $region14: #{tpu_custom_call.1} parent=5 // pred_check_branch
        %225 = sbr.rel (%p223) target = $region16
      $region15: #{tpu_custom_call.1} parent=5 // pred_region
        // Predicated region
        $region17: #{tpu_custom_call.1} parent=15 // pred_check
          %p226 = pneg %p59
        $region18: #{tpu_custom_call.1} parent=15 // pred_check_branch
          %228 = sbr.rel (%p226) target = $region20
        $region19: #{tpu_custom_call.1} parent=15 // pred_region
          %p229 = scmp.lt.s32.totalorder %s25, 1
          %s230 = scalar_select %p229, %s25, 1
          %p231 = scmp.lt.s32.totalorder %s26, 0
          %s232 = scalar_select %p231, %s26, 0
          %s233 = sadd.s32 %s232, %s230
          %s234 = smul.addr %s233, 8
          %s235 = scalar_lea.vmem %s0, %s234
        $region20: #{tpu_custom_call.1} parent=15 // pred_fallthru
          _
        // Predicated region
        $region21: #{tpu_custom_call.1} parent=15 // pred_check
          %p236 = pneg %p85
        $region22: #{tpu_custom_call.1} parent=15 // pred_check_branch
          %238 = sbr.rel (%p236) target = $region24
        $region23: #{tpu_custom_call.1} parent=15 // pred_region
          %p239 = scmp.lt.s32.totalorder %s27, 3
          %s240 = scalar_select %p239, %s27, 3
          %s241 = smul.addr %s240, 4
          %s242 = smul.addr %s241, 4
          %s243 = scalar_lea.vmem %s1, %s242
        $region24: #{tpu_custom_call.1} parent=15 // pred_fallthru
          _
        // Predicated region
        $region25: #{tpu_custom_call.1} parent=15 // pred_check
          %p244 = pneg %p111
        $region26: #{tpu_custom_call.1} parent=15 // pred_check_branch
          %246 = sbr.rel (%p244) target = $region28
        $region27: #{tpu_custom_call.1} parent=15 // pred_region
          %p247 = scmp.lt.s32.totalorder %s27, 3
          %s248 = scalar_select %p247, %s27, 3
          %s249 = scalar_lea.vmem %s2, %s248
        $region28: #{tpu_custom_call.1} parent=15 // pred_fallthru
          _
      $region16: #{tpu_custom_call.1} parent=5 // pred_fallthru
        _
      %p250 = scmp.le.s32.totalorder 1, %s18
      %p251 = scmp.lt.s32.totalorder %s18, 9
      %p252 = pnand %p250, %p251
      %p253 = pneg %p252
      // Predicated region
      $region29: #{tpu_custom_call.1} parent=5 // pred_check
        _
      $region30: #{tpu_custom_call.1} parent=5 // pred_check_branch
        %255 = sbr.rel (%p252) target = $region32
      $region31: #{tpu_custom_call.1} parent=5 // pred_region
        %s256 = ssub.s32 %s18, 1
        %p257 = scmp.lt.s32.totalorder %s28, 1
        %s258 = scalar_select %p257, %s28, 1
        %p259 = scmp.lt.s32.totalorder %s29, 0
        %s260 = scalar_select %p259, %s29, 0
        %s261 = sadd.s32 %s260, %s258
        %s262 = smul.addr %s261, 8
        %s263 = scalar_lea.vmem %s0, %s262
        %p264 = pneg %p65
        %p265 = pneg %p62
        %p266 = scmp.lt.s32.totalorder %s30, 3
        %s267 = scalar_select %p266, %s30, 3
        %s268 = smul.addr %s267, 4
        %s269 = smul.addr %s268, 4
        %s270 = scalar_lea.vmem %s1, %s269
        %p271 = pneg %p91
        %p272 = pneg %p88
        %p273 = scmp.lt.s32.totalorder %s30, 3
        %s274 = scalar_select %p273, %s30, 3
        %s275 = scalar_lea.vmem %s2, %s274
        %p276 = pneg %p117
        %p277 = pneg %p114
        %p278 = pneg %p147
        %p279 = pneg %p144
        %s280 = sand.u32 %s134, 1
        %s281 = scalar_lea.sflag [#allocation3], %s280
        %s282 = sand.u32 %s134, 1
        %s283 = smul.addr %s282, 8
        %s284 = scalar_lea.vmem [#allocation2], %s283
        %p285 = pneg %p177
        %p286 = pneg %p174
        %s287 = sand.u32 %s23, 1
        %s288 = scalar_lea.sflag [#allocation5], %s287
        %s289 = sand.u32 %s164, 1
        %s290 = smul.addr %s289, 8
        %s291 = scalar_lea.vmem [#allocation4], %s290
        %p292 = pneg %p207
        %p293 = pneg %p204
        %s294 = sand.u32 %s23, 1
        %s295 = scalar_lea.sflag [#allocation5], %s294
        %s296 = sand.u32 %s194, 1
        %s297 = smul.addr %s296, 8
        %s298 = scalar_lea.vmem [#allocation6], %s297
        %p299 = scmp.lt.s32.totalorder %s28, 1
        %s300 = scalar_select %p299, %s28, 1
        %p301 = scmp.lt.s32.totalorder %s29, 0
        %s302 = scalar_select %p301, %s29, 0
        %s303 = sadd.s32 %s302, %s300
        %s304 = smul.addr %s303, 8
        %s305 = scalar_lea.vmem %s0, %s304
        %p306 = scmp.lt.s32.totalorder %s30, 3
        %s307 = scalar_select %p306, %s30, 3
        %s308 = smul.addr %s307, 4
        %s309 = smul.addr %s308, 4
        %s310 = scalar_lea.vmem %s1, %s309
        %p311 = scmp.lt.s32.totalorder %s30, 3
        %s312 = scalar_select %p311, %s30, 3
        %s313 = scalar_lea.vmem %s2, %s312
        %v315 = vld [vmem:[%s305] sm:$0xff]
        %v316 = vpack.c.bf16 %v315, %v315
        %v317 = vld [vmem:[%s310] sm:$0xf]
        %v318 = vld [vmem:[%s310 + $0x4] sm:$0xf]
        %v319 = vld [vmem:[%s310 + $0x8] sm:$0xf]
        %v320 = vld [vmem:[%s310 + $0xc] sm:$0xf]
        %v321 = vld [vmem:[%s313] sm:$0x1]
        %v323 = vlaneseq
        %v324 = vshrl.u32 %v323, 7
        %v325 = vsub.s32 0, %v324
        %v326 = vrot.slane %v321, %v325
        %v332 = vunpack.c.l.b16 %v317
        %v333 = vunpack.c.l.b16 %v318
        %v334 = vunpack.c.l.b16 %v319
        %v335 = vunpack.c.l.b16 %v320
        %v336 = vpack.c.b16 %v333, %v332
        %v337 = vpack.c.b16 %v335, %v334
        %vm340 = vcmask 261120
        %v342 = vsel %vm340, %v316, 0
        %344 = vmatprep.subr.bf16.mxu0 0
        %345 = vmatpush1.bf16.msra.mxu0 %v336
        %346 = vmatprep.subr.bf16.mxu0 0
        %347 = vmatpush1.bf16.msra.mxu0 %v337
        %348 = vmatprep.subr.bf16.mxu0 0
        %349 = vmatpush1.bf16.msra.mxu0 0
        %350 = vmatprep.subr.bf16.mxu0 0
        %351 = vmatpush1.bf16.msra.mxu0 0
        %352 = vmatprep.subr.bf16.mxu0 0
        %353 = vmatpush1.bf16.msra.mxu0 0
        %354 = vmatprep.subr.bf16.mxu0 0
        %355 = vmatpush1.bf16.msra.mxu0 0
        %356 = vmatprep.subr.bf16.mxu0 0
        %357 = vmatpush1.bf16.msra.mxu0 0
        %358 = vmatprep.subr.bf16.mxu0 0
        %359 = vmatpush1.bf16.msra.mxu0 0
        %360 = vmatprep.subr.bf16.mxu0 0
        %361 = vmatpush1.bf16.msra.mxu0 0
        %362 = vmatprep.subr.bf16.mxu0 0
        %363 = vmatpush1.bf16.msra.mxu0 0
        %364 = vmatprep.subr.bf16.mxu0 0
        %365 = vmatpush1.bf16.msra.mxu0 0
        %366 = vmatprep.subr.bf16.mxu0 0
        %367 = vmatpush1.bf16.msra.mxu0 0
        %368 = vmatprep.subr.bf16.mxu0 0
        %369 = vmatpush1.bf16.msra.mxu0 0
        %370 = vmatprep.subr.bf16.mxu0 0
        %371 = vmatpush1.bf16.msra.mxu0 0
        %372 = vmatprep.subr.bf16.mxu0 0
        %373 = vmatpush1.bf16.msra.mxu0 0
        %374 = vmatprep.subr.bf16.mxu0 0
        %375 = vmatpush1.bf16.msra.mxu0 0
        %376 = vmatprep.mubr.bf16.mxu0 0
        %377 = vmatmul.mubr.bf16.gmra.mrb[0].mxu0 %v342
        %v378 = vpop.f32.mrb[0].mxu0
        %v379 = vadd.f32 %v326, %v378
        %v380 = vpop.f32.mrb[0].mxu0
        %v381 = vpop.f32.mrb[0].mxu0
        %v382 = vpop.f32.mrb[0].mxu0
        %383 = vdwg.mxu0
        %vm384 = vcmask 64512
        %385 = vst.msk [vmem:[%s284] sm:$0xff] %vm384, %v379
        %387 = vrot.lane.b32.xlu0 %v379, 120
        %v388 = vpop.permute.xlu0 %387
        %390 = vst.msk [vmem:[%s291] sm:$0xff] %vm384, %v388
        %391 = vrot.lane.b32.xlu0 %v379, 112
        %v392 = vpop.permute.xlu0 %391
        %394 = vst.msk [vmem:[%s298] sm:$0xff] %vm384, %v392
        %s395 = sand.u32 %s134, 1
        %s396 = scalar_lea.sflag [#allocation3], %s395
        %s397 = sand.u32 %s134, 1
        %s398 = smul.addr %s397, 8
        %s399 = scalar_lea.vmem [#allocation2], %s398
        %s400 = sand.u32 %s23, 1
        %s401 = scalar_lea.sflag [#allocation5], %s400
        %s402 = sand.u32 %s164, 1
        %s403 = smul.addr %s402, 8
        %s404 = scalar_lea.vmem [#allocation4], %s403
        %s405 = sand.u32 %s23, 1
        %s406 = scalar_lea.sflag [#allocation5], %s405
        %s407 = sand.u32 %s194, 1
        %s408 = smul.addr %s407, 8
        %s409 = scalar_lea.vmem [#allocation6], %s408
        // Predicated region
        $region33: #{tpu_custom_call.1} parent=31 // pred_check
          %p410 = pneg %p144
        $region34: #{tpu_custom_call.1} parent=31 // pred_check_branch
          %412 = sbr.rel (%p410) target = $region36
        $region35: #{tpu_custom_call.1} parent=31 // pred_region
          %s414 = ssub.s32 128, 128
          %415 = vsyncadd %s396, %s414
          %s416 = sadd.s32 %s29, %s30
          %s417 = smul.addr %s28, 4
          %s418 = sadd.s32 %s416, %s417
          %s419 = smul.addr %s418, 128
          %s420 = scalar_lea.hbm %s3, %s419
          %s422 = sshll.u32 %s399, 4
          %s423 = int_to_ptr.vmem [resolvable:$true] %s422
          %425 = dma.vmem_to_hbm [thread:$0]  %s423, 128, %s420, %s396
        $region36: #{tpu_custom_call.1} parent=31 // pred_fallthru
          _
        // Predicated region
        $region37: #{tpu_custom_call.1} parent=31 // pred_check
          %p426 = pneg %p174
        $region38: #{tpu_custom_call.1} parent=31 // pred_check_branch
          %428 = sbr.rel (%p426) target = $region40
        $region39: #{tpu_custom_call.1} parent=31 // pred_region
          %s430 = ssub.s32 128, 128
          %431 = vsyncadd %s401, %s430
          %s432 = sadd.s32 %s29, %s30
          %s433 = smul.addr %s28, 4
          %s434 = sadd.s32 %s432, %s433
          %s435 = smul.addr %s434, 128
          %s436 = scalar_lea.hbm %s4, %s435
          %s438 = sshll.u32 %s404, 4
          %s439 = int_to_ptr.vmem [resolvable:$true] %s438
          %441 = dma.vmem_to_hbm [thread:$0]  %s439, 128, %s436, %s401
        $region40: #{tpu_custom_call.1} parent=31 // pred_fallthru
          _
        // Predicated region
        $region41: #{tpu_custom_call.1} parent=31 // pred_check
          %p442 = pneg %p204
        $region42: #{tpu_custom_call.1} parent=31 // pred_check_branch
          %444 = sbr.rel (%p442) target = $region44
        $region43: #{tpu_custom_call.1} parent=31 // pred_region
          %s446 = ssub.s32 128, 128
          %447 = vsyncadd %s406, %s446
          %s448 = sadd.s32 %s29, %s30
          %s449 = smul.addr %s28, 4
          %s450 = sadd.s32 %s448, %s449
          %s451 = smul.addr %s450, 128
          %s452 = scalar_lea.hbm %s5, %s451
          %s454 = sshll.u32 %s409, 4
          %s455 = int_to_ptr.vmem [resolvable:$true] %s454
          %457 = dma.vmem_to_hbm [thread:$0]  %s455, 128, %s452, %s406
        $region44: #{tpu_custom_call.1} parent=31 // pred_fallthru
          _
      $region32: #{tpu_custom_call.1} parent=5 // pred_fallthru
        _
      %p458 = scmp.le.s32.totalorder 2, %s18
      // Predicated region
      $region45: #{tpu_custom_call.1} parent=5 // pred_check
        %p459 = pneg %p458
      $region46: #{tpu_custom_call.1} parent=5 // pred_check_branch
        %461 = sbr.rel (%p459) target = $region48
      $region47: #{tpu_custom_call.1} parent=5 // pred_region
        %s462 = ssub.s32 %s18, 2
        // Predicated region
        $region49: #{tpu_custom_call.1} parent=47 // pred_check
          %p463 = pneg %p150
        $region50: #{tpu_custom_call.1} parent=47 // pred_check_branch
          %465 = sbr.rel (%p463) target = $region52
        $region51: #{tpu_custom_call.1} parent=47 // pred_region
          %s466 = sand.u32 %s135, 1
          %s467 = scalar_lea.sflag [#allocation3], %s466
          %s468 = sand.u32 %s135, 1
          %s469 = smul.addr %s468, 8
          %s470 = scalar_lea.vmem [#allocation2], %s469
          %471 = dma.done %s467, 128
        $region52: #{tpu_custom_call.1} parent=47 // pred_fallthru
          _
        // Predicated region
        $region53: #{tpu_custom_call.1} parent=47 // pred_check
          %p472 = pneg %p180
        $region54: #{tpu_custom_call.1} parent=47 // pred_check_branch
          %474 = sbr.rel (%p472) target = $region56
        $region55: #{tpu_custom_call.1} parent=47 // pred_region
          %s475 = sand.u32 %s24, 1
          %s476 = scalar_lea.sflag [#allocation5], %s475
          %s477 = sand.u32 %s165, 1
          %s478 = smul.addr %s477, 8
          %s479 = scalar_lea.vmem [#allocation4], %s478
          %480 = dma.done %s476, 128
        $region56: #{tpu_custom_call.1} parent=47 // pred_fallthru
          _
        // Predicated region
        $region57: #{tpu_custom_call.1} parent=47 // pred_check
          %p481 = pneg %p210
        $region58: #{tpu_custom_call.1} parent=47 // pred_check_branch
          %483 = sbr.rel (%p481) target = $region60
        $region59: #{tpu_custom_call.1} parent=47 // pred_region
          %s484 = sand.u32 %s24, 1
          %s485 = scalar_lea.sflag [#allocation5], %s484
          %s486 = sand.u32 %s195, 1
          %s487 = smul.addr %s486, 8
          %s488 = scalar_lea.vmem [#allocation6], %s487
          %489 = dma.done %s485, 128
        $region60: #{tpu_custom_call.1} parent=47 // pred_fallthru
          _
      $region48: #{tpu_custom_call.1} parent=5 // pred_fallthru
        _
    $region6: #{tpu_custom_call.1} parent=1 // loop_footer
      %s22 = sadd.s32 1, %s18
    $region7: #{tpu_custom_call.1} parent=1 // loop_footer_branch
      %17 = sbr.rel target = $region3
    $region8: #{tpu_custom_call.1} parent=1 // loop_exit
      _
    %490 = vsyncpa [#allocation3], 1
    %s491 = scalar_lea.sflag [#allocation3], 1
    %492 = vsyncpa %s491, 1
    %493 = vsyncpa [#allocation5], 1
    %s494 = scalar_lea.sflag [#allocation5], 1
    %495 = vsyncpa %s494, 1

</llo_original>
